<compile_context>
chip_gen: v7x
topology: tpu7x:2x2x1
jax: 0.10.0
libtpu: 0.0.40
codegen_flags: <defaults>
</compile_context>

<pallas_src>
import math

import jax
import jax.numpy as jnp
from jax import lax
from jax.experimental import pallas as pl
from jax.experimental.pallas import tpu as pltpu

STATE_DIM = 32
ACTION_DIM = 8
HIDDEN = 64
H2 = 2 * HIDDEN          # 128 = fused actor||critic width (one full lane dim)
BATCH = 8
ACTION_STD_INIT = 0.6

LOG_2PI = math.log(2.0 * math.pi)


def _round_up(x, m):
    return ((x + m - 1) // m) * m


# ----------------------------------------------------------------------------------
# Kernel
# ----------------------------------------------------------------------------------
def _actor_critic_kernel(data_ref, w_ref, b_ref, out_ref):
    # data_ref : (2, TB, 128)  [0] = state padded to 128 lanes, [1] = action padded
    # w_ref    : (3, 128, 128) packed fused weights (see pack_params)
    # b_ref    : (8, 128)      rows: 0=b1, 1=b2, 2=b3, 3=inv_var(padded), 4[0]=logp const
    # out_ref  : (TB, 128)     lane 0 = logp, lane 1 = value, lane 2 = NaN flag
    x = data_ref[0]                              # (TB, 128)
    a = data_ref[1]                              # (TB, 128)

    w1 = w_ref[0]                                # (128, 128) rows >= STATE_DIM are zero
    w2 = w_ref[1]                                # block-diag(aw2, cw2)
    w3 = w_ref[2]                                # actor -> lanes 0..7, critic -> lane 8

    b1 = b_ref[0:1, :]                           # (1, 128)
    b2 = b_ref[1:2, :]
    b3 = b_ref[2:3, :]
    inv_var = b_ref[3:4, :]                      # (1, 128), zero beyond ACTION_DIM
    logp_c = b_ref[4:5, 0:1]                     # (1, 1)  = k*log(2pi) + sum(log var)

    # fused actor||critic MLP: 3 lane-dense matmuls on the MXU
    h = jnp.tanh(jnp.dot(x, w1, preferred_element_type=jnp.float32) + b1)
    h = jnp.tanh(jnp.dot(h, w2, preferred_element_type=jnp.float32) + b2)
    z3 = jnp.dot(h, w3, preferred_element_type=jnp.float32) + b3        # (TB, 128)

    # actor mean (tanh) lives in lanes 0..ACTION_DIM-1; critic value (no tanh) in lane 8
    mean_full = jnp.tanh(z3)
    diff = a - mean_full                                                  # pad lanes -> 0
    maha = jnp.sum(diff * diff * inv_var, axis=-1, keepdims=True)         # (TB, 1)
    logp = -0.5 * (logp_c + maha)                                         # (TB, 1)
    value = z3[:, ACTION_DIM:ACTION_DIM + 1]                              # (TB, 1) pre-tanh

    # in-kernel NaN detection (data already in VMEM -> no extra HBM pass)
    nan_mask = jnp.logical_or(jnp.isnan(x), jnp.isnan(a)).astype(jnp.float32)
    bad_row = jnp.max(nan_mask, axis=-1, keepdims=True)                   # (TB, 1)

    lane = lax.broadcasted_iota(jnp.int32, z3.shape, 1)
    out = jnp.where(lane == 0, logp,
                    jnp.where(lane == 1, value,
                              jnp.where(lane == 2, bad_row, 0.0)))
    out_ref[...] = out


# ----------------------------------------------------------------------------------
# Host-side packing helpers
# ----------------------------------------------------------------------------------
def pack_params(params, action_var):
    """Pack 6 weight matrices / 6 biases / action_var into two padded fp32 slabs."""
    w_slab = jnp.zeros((3, H2, H2), jnp.float32)
    # layer 1: (STATE_DIM, 128) = aw1 || cw1
    w_slab = w_slab.at[0, :STATE_DIM, :HIDDEN].set(params["aw1"])
    w_slab = w_slab.at[0, :STATE_DIM, HIDDEN:].set(params["cw1"])
    # layer 2: block-diagonal (128, 128)
    w_slab = w_slab.at[1, :HIDDEN, :HIDDEN].set(params["aw2"])
    w_slab = w_slab.at[1, HIDDEN:, HIDDEN:].set(params["cw2"])
    # layer 3: actor head -> lanes 0..ACTION_DIM-1, critic head -> lane ACTION_DIM
    w_slab = w_slab.at[2, :HIDDEN, :ACTION_DIM].set(params["aw3"])
    w_slab = w_slab.at[2, HIDDEN:, ACTION_DIM:ACTION_DIM + 1].set(params["cw3"])

    sum_log_var = jnp.sum(jnp.log(action_var))
    logp_const = ACTION_DIM * LOG_2PI + sum_log_var

    b_slab = jnp.zeros((8, H2), jnp.float32)
    b_slab = b_slab.at[0, :HIDDEN].set(params["ab1"][0])
    b_slab = b_slab.at[0, HIDDEN:].set(params["cb1"][0])
    b_slab = b_slab.at[1, :HIDDEN].set(params["ab2"][0])
    b_slab = b_slab.at[1, HIDDEN:].set(params["cb2"][0])
    b_slab = b_slab.at[2, :ACTION_DIM].set(params["ab3"][0])
    b_slab = b_slab.at[2, ACTION_DIM].set(params["cb3"][0, 0])
    b_slab = b_slab.at[3, :ACTION_DIM].set(1.0 / action_var)
    b_slab = b_slab.at[4, 0].set(logp_const)
    return w_slab, b_slab, sum_log_var


def pack_inputs(state, action, tb):
    B = state.shape[0]
    Bp = _round_up(B, tb)
    data = jnp.zeros((2, Bp, H2), jnp.float32)
    data = data.at[0, :B, :STATE_DIM].set(state)
    data = data.at[1, :B, :ACTION_DIM].set(action)
    return data, Bp


# ----------------------------------------------------------------------------------
# Public entry point:  Pallas equivalent of ActorCritic.evaluate(state, action)
# ----------------------------------------------------------------------------------
def actor_critic_evaluate(state, action, params, action_var, block_rows=256):
    """Returns (action_logprobs [B], state_values [B,1], dist_entropy [B])."""
    B = state.shape[0]
    TB = min(block_rows, _round_up(B, 8))          # batch tile (multiple of 8 sublanes)
    data, Bp = pack_inputs(state, action, TB)
    w_slab, b_slab, sum_log_var = pack_params(params, action_var)

    grid = (Bp // TB,)
    out = pl.pallas_call(
        _actor_critic_kernel,
        out_shape=jax.ShapeDtypeStruct((Bp, H2), jnp.float32),
        grid_spec=pltpu.PrefetchScalarGridSpec(
            num_scalar_prefetch=0,
            grid=grid,
            in_specs=[
                pl.BlockSpec((2, TB, H2), lambda i: (0, i, 0)),   # state/action slab
                pl.BlockSpec((3, H2, H2), lambda i: (0, 0, 0)),   # weights, VMEM-resident
                pl.BlockSpec((8, H2), lambda i: (0, 0)),          # biases / inv_var / const
            ],
            out_specs=pl.BlockSpec((TB, H2), lambda i: (i, 0)),
        ),
        compiler_params=pltpu.CompilerParams(
            dimension_semantics=("parallel",)),                    # 2 TCs on v7x
    )(data, w_slab, b_slab)

    out = out[:B]
    # batch-wide NaN guard, matching the torch module's semantics
    bad = jnp.any(out[:, 2] > 0.0)
    logp = jnp.where(bad, 0.0, out[:, 0])
    value = jnp.where(bad, jnp.zeros_like(out[:, 1:2]), out[:, 1:2])
    k = jnp.float32(ACTION_DIM)
    entropy_scalar = 0.5 * (k * (1.0 + LOG_2PI) + sum_log_var)     # depends only on var
    entropy = jnp.where(bad, 0.0, jnp.broadcast_to(entropy_scalar, (B,)))
    return logp, value, entropy


# ----------------------------------------------------------------------------------
# Reference (plain JAX) and init
# ----------------------------------------------------------------------------------
def reference_evaluate(state, action, params, action_var):
    h = jnp.tanh(state @ params["aw1"] + params["ab1"])
    h = jnp.tanh(h @ params["aw2"] + params["ab2"])
    mean = jnp.tanh(h @ params["aw3"] + params["ab3"])
    c = jnp.tanh(state @ params["cw1"] + params["cb1"])
    c = jnp.tanh(c @ params["cw2"] + params["cb2"])
    value = c @ params["cw3"] + params["cb3"]
    slv = jnp.sum(jnp.log(action_var))
    diff = action - mean
    maha = jnp.sum(diff * diff / action_var, axis=-1)
    logp = -0.5 * (ACTION_DIM * LOG_2PI + slv + maha)
    ent = jnp.broadcast_to(0.5 * (ACTION_DIM * (1.0 + LOG_2PI) + slv),
                           (state.shape[0],))
    return logp, value, ent


def init_params(key):
    """Deterministic parameter init matching nn.Linear shapes (stored transposed)."""
    def linear(key, fan_in, fan_out):
        kw, kb = jax.random.split(key)
        bound = 1.0 / math.sqrt(fan_in)
        w = jax.random.uniform(kw, (fan_in, fan_out), jnp.float32, -bound, bound)
        b = jax.random.uniform(kb, (1, fan_out), jnp.float32, -bound, bound)
        return w, b

    keys = jax.random.split(key, 6)
    aw1, ab1 = linear(keys[0], STATE_DIM, HIDDEN)
    aw2, ab2 = linear(keys[1], HIDDEN, HIDDEN)
    aw3, ab3 = linear(keys[2], HIDDEN, ACTION_DIM)
    cw1, cb1 = linear(keys[3], STATE_DIM, HIDDEN)
    cw2, cb2 = linear(keys[4], HIDDEN, HIDDEN)
    cw3, cb3 = linear(keys[5], HIDDEN, 1)
    return dict(aw1=aw1, ab1=ab1, aw2=aw2, ab2=ab2, aw3=aw3, ab3=ab3,
                cw1=cw1, cb1=cb1, cw2=cw2, cb2=cb2, cw3=cw3, cb3=cb3)


if __name__ == "__main__":
    key = jax.random.PRNGKey(0)
    k_params, k_state, k_action = jax.random.split(key, 3)

    params = init_params(k_params)
    action_var = jnp.full((ACTION_DIM,), ACTION_STD_INIT * ACTION_STD_INIT,
                          dtype=jnp.float32)

    state = jax.random.normal(k_state, (BATCH, STATE_DIM), dtype=jnp.float32)
    action = jax.random.normal(k_action, (BATCH, ACTION_DIM), dtype=jnp.float32)

    evaluate = jax.jit(actor_critic_evaluate, static_argnames=("block_rows",))
    logp, values, entropy = evaluate(state, action, params, action_var)
    jax.block_until_ready((logp, values, entropy))

    # Correctness check against a plain-JAX reference of the torch module.
    ref_logp, ref_values, ref_ent = reference_evaluate(state, action, params, action_var)
    assert logp.shape == (BATCH,)
    assert values.shape == (BATCH, 1)
    assert entropy.shape == (BATCH,)
    assert bool(jnp.allclose(logp, ref_logp, rtol=1e-3, atol=1e-3))
    assert bool(jnp.allclose(values, ref_values, rtol=1e-3, atol=1e-3))
    assert bool(jnp.allclose(entropy, ref_ent, rtol=1e-3, atol=1e-3))

    # TODO(synk): ActorCritic.act() samples from the MVN (dist.sample()); stochastic
    # sampling is left to the host/JAX side and is not part of this deterministic kernel.
    print("KERNEL_OK")
</pallas_src>

<mosaic_0001>
module attributes {stable_mosaic.version = 11 : i64} {
  func.func @_actor_critic_kernel(%arg0: i32, %arg1: memref<2x8x128xf32, #tpu.memory_space<vmem>>, %arg2: memref<3x128x128xf32, #tpu.memory_space<vmem>>, %arg3: memref<8x128xf32, #tpu.memory_space<vmem>>, %arg4: memref<8x128xf32, #tpu.memory_space<vmem>>) attributes {dimension_semantics = [#tpu.dimension_semantics<parallel>], iteration_bounds = array<i64: 1>, scalar_prefetch = 0 : i64, scratch_operands = 0 : i64, tpu.core_type = #tpu.core_type<tc>, window_params = [{transform_indices = @transform_0, window_bounds = array<i64: 2, 8, 128>}, {pipeline_mode = #tpu.pipeline_mode<synchronous>, transform_indices = @transform_1, window_bounds = array<i64: 3, 128, 128>}, {pipeline_mode = #tpu.pipeline_mode<synchronous>, transform_indices = @transform_2, window_bounds = array<i64: 8, 128>}, {transform_indices = @transform_3, window_bounds = array<i64: 8, 128>}]} {
    %c0 = arith.constant 0 : index
    %c0_0 = arith.constant 0 : index
    %c0_1 = arith.constant 0 : index
    %0 = vector.load %arg1[%c0, %c0_0, %c0_1] : memref<2x8x128xf32, #tpu.memory_space<vmem>>, vector<1x8x128xf32>
    %1 = vector.shape_cast %0 : vector<1x8x128xf32> to vector<8x128xf32>
    %c1 = arith.constant 1 : index
    %c0_2 = arith.constant 0 : index
    %c0_3 = arith.constant 0 : index
    %2 = vector.load %arg1[%c1, %c0_2, %c0_3] : memref<2x8x128xf32, #tpu.memory_space<vmem>>, vector<1x8x128xf32>
    %3 = vector.shape_cast %2 : vector<1x8x128xf32> to vector<8x128xf32>
    %c0_4 = arith.constant 0 : index
    %c0_5 = arith.constant 0 : index
    %c0_6 = arith.constant 0 : index
    %4 = vector.load %arg2[%c0_4, %c0_5, %c0_6] : memref<3x128x128xf32, #tpu.memory_space<vmem>>, vector<1x128x128xf32>
    %5 = vector.shape_cast %4 : vector<1x128x128xf32> to vector<128x128xf32>
    %c1_7 = arith.constant 1 : index
    %c0_8 = arith.constant 0 : index
    %c0_9 = arith.constant 0 : index
    %6 = vector.load %arg2[%c1_7, %c0_8, %c0_9] : memref<3x128x128xf32, #tpu.memory_space<vmem>>, vector<1x128x128xf32>
    %7 = vector.shape_cast %6 : vector<1x128x128xf32> to vector<128x128xf32>
    %c2 = arith.constant 2 : index
    %c0_10 = arith.constant 0 : index
    %c0_11 = arith.constant 0 : index
    %8 = vector.load %arg2[%c2, %c0_10, %c0_11] : memref<3x128x128xf32, #tpu.memory_space<vmem>>, vector<1x128x128xf32>
    %9 = vector.shape_cast %8 : vector<1x128x128xf32> to vector<128x128xf32>
    %c0_12 = arith.constant 0 : index
    %c0_13 = arith.constant 0 : index
    %10 = vector.load %arg3[%c0_12, %c0_13] : memref<8x128xf32, #tpu.memory_space<vmem>>, vector<1x128xf32>
    %c1_14 = arith.constant 1 : index
    %c0_15 = arith.constant 0 : index
    %11 = vector.load %arg3[%c1_14, %c0_15] : memref<8x128xf32, #tpu.memory_space<vmem>>, vector<1x128xf32>
    %c2_16 = arith.constant 2 : index
    %c0_17 = arith.constant 0 : index
    %12 = vector.load %arg3[%c2_16, %c0_17] : memref<8x128xf32, #tpu.memory_space<vmem>>, vector<1x128xf32>
    %c3 = arith.constant 3 : index
    %c0_18 = arith.constant 0 : index
    %13 = vector.load %arg3[%c3, %c0_18] : memref<8x128xf32, #tpu.memory_space<vmem>>, vector<1x128xf32>
    %c4 = arith.constant 4 : index
    %c0_19 = arith.constant 0 : index
    %14 = vector.load %arg3[%c4, %c0_19] : memref<8x128xf32, #tpu.memory_space<vmem>>, vector<1x1xf32>
    %cst = arith.constant dense<0.000000e+00> : vector<8x128xf32>
    %15 = tpu.matmul %1, %5, %cst {dimension_numbers = #tpu.dot_dimension_numbers<[1], [0], [0], [1], [0, 0, 1, 1], [], []>} : vector<8x128xf32>, vector<128x128xf32>, vector<8x128xf32> -> vector<8x128xf32>
    %16 = vector.broadcast %10 : vector<1x128xf32> to vector<8x128xf32>
    %17 = arith.addf %15, %16 : vector<8x128xf32>
    %18 = math.tanh %17 : vector<8x128xf32>
    %cst_20 = arith.constant dense<0.000000e+00> : vector<8x128xf32>
    %19 = tpu.matmul %18, %7, %cst_20 {dimension_numbers = #tpu.dot_dimension_numbers<[1], [0], [0], [1], [0, 0, 1, 1], [], []>} : vector<8x128xf32>, vector<128x128xf32>, vector<8x128xf32> -> vector<8x128xf32>
    %20 = vector.broadcast %11 : vector<1x128xf32> to vector<8x128xf32>
    %21 = arith.addf %19, %20 : vector<8x128xf32>
    %22 = math.tanh %21 : vector<8x128xf32>
    %cst_21 = arith.constant dense<0.000000e+00> : vector<8x128xf32>
    %23 = tpu.matmul %22, %9, %cst_21 {dimension_numbers = #tpu.dot_dimension_numbers<[1], [0], [0], [1], [0, 0, 1, 1], [], []>} : vector<8x128xf32>, vector<128x128xf32>, vector<8x128xf32> -> vector<8x128xf32>
    %24 = vector.broadcast %12 : vector<1x128xf32> to vector<8x128xf32>
    %25 = arith.addf %23, %24 : vector<8x128xf32>
    %26 = math.tanh %25 : vector<8x128xf32>
    %27 = arith.subf %3, %26 : vector<8x128xf32>
    %28 = arith.mulf %27, %27 : vector<8x128xf32>
    %29 = vector.broadcast %13 : vector<1x128xf32> to vector<8x128xf32>
    %30 = arith.mulf %28, %29 : vector<8x128xf32>
    %cst_22 = arith.constant dense<0.000000e+00> : vector<8xf32>
    %31 = vector.multi_reduction <add>, %30, %cst_22 [1] : vector<8x128xf32> to vector<8xf32>
    %32 = vector.shape_cast %31 : vector<8xf32> to vector<8x1xf32>
    %33 = vector.broadcast %14 : vector<1x1xf32> to vector<8x1xf32>
    %34 = arith.addf %33, %32 : vector<8x1xf32>
    %cst_23 = arith.constant -5.000000e-01 : f32
    %35 = vector.broadcast %cst_23 : f32 to vector<8x1xf32>
    %36 = arith.mulf %35, %34 : vector<8x1xf32>
    %37 = vector.extract_strided_slice %25 {offsets = [0, 8], sizes = [8, 1], strides = [1, 1]} : vector<8x128xf32> to vector<8x1xf32>
    %38 = arith.cmpf one, %1, %1 : vector<8x128xf32>
    %39 = arith.cmpf one, %3, %3 : vector<8x128xf32>
    %40 = arith.ori %38, %39 : vector<8x128xi1>
    %41 = arith.extui %40 : vector<8x128xi1> to vector<8x128xi32>
    %42 = arith.sitofp %41 : vector<8x128xi32> to vector<8x128xf32>
    %cst_24 = arith.constant dense<0xFF800000> : vector<8xf32>
    %43 = vector.multi_reduction <maximumf>, %42, %cst_24 [1] : vector<8x128xf32> to vector<8xf32>
    %44 = vector.shape_cast %43 : vector<8xf32> to vector<8x1xf32>
    %45 = tpu.iota {dimensions = array<i32: 1>} : vector<8x128xi32>
    %c0_i32 = arith.constant 0 : i32
    %46 = vector.broadcast %c0_i32 : i32 to vector<8x128xi32>
    %47 = arith.cmpi eq, %45, %46 : vector<8x128xi32>
    %c1_i32 = arith.constant 1 : i32
    %48 = vector.broadcast %c1_i32 : i32 to vector<8x128xi32>
    %49 = arith.cmpi eq, %45, %48 : vector<8x128xi32>
    %c2_i32 = arith.constant 2 : i32
    %50 = vector.broadcast %c2_i32 : i32 to vector<8x128xi32>
    %51 = arith.cmpi eq, %45, %50 : vector<8x128xi32>
    %cst_25 = arith.constant 0.000000e+00 : f32
    %52 = vector.shape_cast %44 : vector<8x1xf32> to vector<8x1xf32>
    %53 = vector.broadcast %52 : vector<8x1xf32> to vector<8x128xf32>
    %54 = vector.broadcast %cst_25 : f32 to vector<8x128xf32>
    %55 = arith.select %51, %53, %54 : vector<8x128xi1>, vector<8x128xf32>
    %56 = vector.shape_cast %37 : vector<8x1xf32> to vector<8x1xf32>
    %57 = vector.broadcast %56 : vector<8x1xf32> to vector<8x128xf32>
    %58 = arith.select %49, %57, %55 : vector<8x128xi1>, vector<8x128xf32>
    %59 = vector.shape_cast %36 : vector<8x1xf32> to vector<8x1xf32>
    %60 = vector.broadcast %59 : vector<8x1xf32> to vector<8x128xf32>
    %61 = arith.select %47, %60, %58 : vector<8x128xi1>, vector<8x128xf32>
    %c0_26 = arith.constant 0 : index
    %c0_27 = arith.constant 0 : index
    %62 = vector.load %arg4[%c0_26, %c0_27] : memref<8x128xf32, #tpu.memory_space<vmem>>, vector<8x128xf32>
    tpu.vector_store %arg4[%c0_26, %c0_27], %61 {strides = array<i32>} : memref<8x128xf32, #tpu.memory_space<vmem>>, vector<8x128xf32>,
    return
  }
  func.func @transform_0(%arg0: i32) -> (i32, i32, i32) {
    %c0_i32 = arith.constant 0 : i32
    %c0_i32_0 = arith.constant 0 : i32
    %c0_i32_1 = arith.constant 0 : i32
    return %c0_i32, %arg0, %c0_i32_0 : i32, i32, i32
  }
  func.func @transform_1(%arg0: i32) -> (i32, i32, i32) {
    %c0_i32 = arith.constant 0 : i32
    %c0_i32_0 = arith.constant 0 : i32
    %c0_i32_1 = arith.constant 0 : i32
    %c0_i32_2 = arith.constant 0 : i32
    return %c0_i32, %c0_i32_0, %c0_i32_1 : i32, i32, i32
  }
  func.func @transform_2(%arg0: i32) -> (i32, i32) {
    %c0_i32 = arith.constant 0 : i32
    %c0_i32_0 = arith.constant 0 : i32
    %c0_i32_1 = arith.constant 0 : i32
    return %c0_i32, %c0_i32_0 : i32, i32
  }
  func.func @transform_3(%arg0: i32) -> (i32, i32) {
    %c0_i32 = arith.constant 0 : i32
    %c0_i32_0 = arith.constant 0 : i32
    return %arg0, %c0_i32 : i32, i32
  }
}

</mosaic_0001>

<llo_original>
// kernel: actor_critic_evaluate.1
$region0: #{actor_critic_evaluate.1}
  #allocation0 [shape = 'u32[]', space=smem, size = 0x4, offset = 0x4, fixed_abs, tag = 'smem constant byte address 0x4 - core index']
  #allocation1 [shape = 'u32[144,128]{1,0:T(1,128)}', space=vmem, size = 0x12000, scoped, tag = 'internal scratch']
  %s0 = inlined_call_operand.vmem [shape: f32[2,8,128], index: 0, kind: input, shape index: {}]
  %s1 = inlined_call_operand.vmem [shape: f32[3,128,128], index: 1, kind: input, shape index: {}]
  %s2 = inlined_call_operand.vmem [shape: f32[8,128], index: 2, kind: input, shape index: {}]
  %s3 = inlined_call_operand.vmem [shape: f32[8,128], index: 3, kind: output, shape index: {}]
  %s4 = sld [smem:[#allocation0]]
  $region22: #{actor_critic_evaluate.1} parent=0
    _
  %s6 = ssub.s32 1, %s4
  %s7 = scalar_select 0, %s6, %s4
  // Predicated region
  $region2: #{actor_critic_evaluate.1} parent=0 // pred_check
    _
  $region3: #{actor_critic_evaluate.1} parent=0 // pred_check_branch
    %9 = sbr.rel (0) target = $region5
  $region4: #{actor_critic_evaluate.1} parent=0 // pred_region
    _
  $region5: #{actor_critic_evaluate.1} parent=0 // pred_fallthru
    _
  // Predicated region
  $region6: #{actor_critic_evaluate.1} parent=0 // pred_check
    _
  $region7: #{actor_critic_evaluate.1} parent=0 // pred_check_branch
    %11 = sbr.rel (0) target = $region9
  $region8: #{actor_critic_evaluate.1} parent=0 // pred_region
    _
  $region9: #{actor_critic_evaluate.1} parent=0 // pred_fallthru
    _
  // Predicated region
  $region10: #{actor_critic_evaluate.1} parent=0 // pred_check
    _
  $region11: #{actor_critic_evaluate.1} parent=0 // pred_check_branch
    %13 = sbr.rel (0) target = $region13
  $region12: #{actor_critic_evaluate.1} parent=0 // pred_region
    _
  $region13: #{actor_critic_evaluate.1} parent=0 // pred_fallthru
    _
  %v14 = vld [vmem:[%s0] sm:$0xff]
  %s15 = scalar_lea.vmem %s0, 8
  %v16 = vld [vmem:[%s15] sm:$0xff]
  %v17 = vld [vmem:[%s1] sm:$0xff]
  %v18 = vld [vmem:[%s1 + $0x8] sm:$0xff]
  %v19 = vld [vmem:[%s1 + $0x10] sm:$0xff]
  %v20 = vld [vmem:[%s1 + $0x18] sm:$0xff]
  %v21 = vld [vmem:[%s1 + $0x20] sm:$0xff]
  %v22 = vld [vmem:[%s1 + $0x28] sm:$0xff]
  %v23 = vld [vmem:[%s1 + $0x30] sm:$0xff]
  %v24 = vld [vmem:[%s1 + $0x38] sm:$0xff]
  %v25 = vld [vmem:[%s1 + $0x40] sm:$0xff]
  %v26 = vld [vmem:[%s1 + $0x48] sm:$0xff]
  %v27 = vld [vmem:[%s1 + $0x50] sm:$0xff]
  %v28 = vld [vmem:[%s1 + $0x58] sm:$0xff]
  %v29 = vld [vmem:[%s1 + $0x60] sm:$0xff]
  %v30 = vld [vmem:[%s1 + $0x68] sm:$0xff]
  %v31 = vld [vmem:[%s1 + $0x70] sm:$0xff]
  %v32 = vld [vmem:[%s1 + $0x78] sm:$0xff]
  %s33 = scalar_lea.vmem %s1, 128
  %v34 = vld [vmem:[%s33] sm:$0xff]
  %v35 = vld [vmem:[%s33 + $0x8] sm:$0xff]
  %v36 = vld [vmem:[%s33 + $0x10] sm:$0xff]
  %v37 = vld [vmem:[%s33 + $0x18] sm:$0xff]
  %v38 = vld [vmem:[%s33 + $0x20] sm:$0xff]
  %v39 = vld [vmem:[%s33 + $0x28] sm:$0xff]
  %v40 = vld [vmem:[%s33 + $0x30] sm:$0xff]
  %v41 = vld [vmem:[%s33 + $0x38] sm:$0xff]
  %v42 = vld [vmem:[%s33 + $0x40] sm:$0xff]
  %v43 = vld [vmem:[%s33 + $0x48] sm:$0xff]
  %v44 = vld [vmem:[%s33 + $0x50] sm:$0xff]
  %v45 = vld [vmem:[%s33 + $0x58] sm:$0xff]
  %v46 = vld [vmem:[%s33 + $0x60] sm:$0xff]
  %v47 = vld [vmem:[%s33 + $0x68] sm:$0xff]
  %v48 = vld [vmem:[%s33 + $0x70] sm:$0xff]
  %v49 = vld [vmem:[%s33 + $0x78] sm:$0xff]
  %s50 = scalar_lea.vmem %s1, 256
  %v51 = vld [vmem:[%s50] sm:$0xff]
  %v52 = vld [vmem:[%s50 + $0x8] sm:$0xff]
  %v53 = vld [vmem:[%s50 + $0x10] sm:$0xff]
  %v54 = vld [vmem:[%s50 + $0x18] sm:$0xff]
  %v55 = vld [vmem:[%s50 + $0x20] sm:$0xff]
  %v56 = vld [vmem:[%s50 + $0x28] sm:$0xff]
  %v57 = vld [vmem:[%s50 + $0x30] sm:$0xff]
  %v58 = vld [vmem:[%s50 + $0x38] sm:$0xff]
  %v59 = vld [vmem:[%s50 + $0x40] sm:$0xff]
  %v60 = vld [vmem:[%s50 + $0x48] sm:$0xff]
  %v61 = vld [vmem:[%s50 + $0x50] sm:$0xff]
  %v62 = vld [vmem:[%s50 + $0x58] sm:$0xff]
  %v63 = vld [vmem:[%s50 + $0x60] sm:$0xff]
  %v64 = vld [vmem:[%s50 + $0x68] sm:$0xff]
  %v65 = vld [vmem:[%s50 + $0x70] sm:$0xff]
  %v66 = vld [vmem:[%s50 + $0x78] sm:$0xff]
  %v67 = vld [vmem:[%s2] sm:$0x1]
  %v68 = vld [vmem:[%s2 + $0x1] sm:$0x1]
  %v69 = vld [vmem:[%s2 + $0x2] sm:$0x1]
  %v70 = vld [vmem:[%s2 + $0x3] sm:$0x1]
  %v71 = vld [vmem:[%s2 + $0x4] sm:$0x1]
  %v72 = vlaneseq
  %v73 = vshrl.u32 %v72, 7
  %v74 = vsub.s32 0, %v73
  %v75 = vrot.slane %v67, %v74
  %76 = vmatprep.subr.mxu0 0.0
  %77 = vmatpush1.msra.mxu0 %v17
  %78 = vmatprep.subr.mxu0 0.0
  %79 = vmatpush1.msra.mxu0 %v18
  %80 = vmatprep.subr.mxu0 0.0
  %81 = vmatpush1.msra.mxu0 %v19
  %82 = vmatprep.subr.mxu0 0.0
  %83 = vmatpush1.msra.mxu0 %v20
  %84 = vmatprep.subr.mxu0 0.0
  %85 = vmatpush1.msra.mxu0 %v21
  %86 = vmatprep.subr.mxu0 0.0
  %87 = vmatpush1.msra.mxu0 %v22
  %88 = vmatprep.subr.mxu0 0.0
  %89 = vmatpush1.msra.mxu0 %v23
  %90 = vmatprep.subr.mxu0 0.0
  %91 = vmatpush1.msra.mxu0 %v24
  %92 = vmatprep.subr.mxu0 0.0
  %93 = vmatpush1.msra.mxu0 %v25
  %94 = vmatprep.subr.mxu0 0.0
  %95 = vmatpush1.msra.mxu0 %v26
  %96 = vmatprep.subr.mxu0 0.0
  %97 = vmatpush1.msra.mxu0 %v27
  %98 = vmatprep.subr.mxu0 0.0
  %99 = vmatpush1.msra.mxu0 %v28
  %100 = vmatprep.subr.mxu0 0.0
  %101 = vmatpush1.msra.mxu0 %v29
  %102 = vmatprep.subr.mxu0 0.0
  %103 = vmatpush1.msra.mxu0 %v30
  %104 = vmatprep.subr.mxu0 0.0
  %105 = vmatpush1.msra.mxu0 %v31
  %106 = vmatprep.subr.mxu0 0.0
  %107 = vmatpush1.msra.mxu0 %v32
  %108 = vmatprep.subr.mxu0 0.0
  %109 = vmatpush1.msra.mxu0 0.0
  %110 = vmatprep.subr.mxu0 0.0
  %111 = vmatpush1.msra.mxu0 0.0
  %112 = vmatprep.subr.mxu0 0.0
  %113 = vmatpush1.msra.mxu0 0.0
  %114 = vmatprep.subr.mxu0 0.0
  %115 = vmatpush1.msra.mxu0 0.0
  %116 = vmatprep.subr.mxu0 0.0
  %117 = vmatpush1.msra.mxu0 0.0
  %118 = vmatprep.subr.mxu0 0.0
  %119 = vmatpush1.msra.mxu0 0.0
  %120 = vmatprep.subr.mxu0 0.0
  %121 = vmatpush1.msra.mxu0 0.0
  %122 = vmatprep.subr.mxu0 0.0
  %123 = vmatpush1.msra.mxu0 0.0
  %124 = vmatprep.subr.mxu0 0.0
  %125 = vmatpush1.msra.mxu0 0.0
  %126 = vmatprep.subr.mxu0 0.0
  %127 = vmatpush1.msra.mxu0 0.0
  %128 = vmatprep.subr.mxu0 0.0
  %129 = vmatpush1.msra.mxu0 0.0
  %130 = vmatprep.subr.mxu0 0.0
  %131 = vmatpush1.msra.mxu0 0.0
  %132 = vmatprep.subr.mxu0 0.0
  %133 = vmatpush1.msra.mxu0 0.0
  %134 = vmatprep.subr.mxu0 0.0
  %135 = vmatpush1.msra.mxu0 0.0
  %136 = vmatprep.subr.mxu0 0.0
  %137 = vmatpush1.msra.mxu0 0.0
  %138 = vmatprep.subr.mxu0 0.0
  %139 = vmatpush1.msra.mxu0 0.0
  %140 = vmatprep.mubr.f32.mxu0 0.0
  %141 = vmatmul.mubr.f32.gmra.mrb[0].mxu0 %v14
  %v142 = vpop.f32.mrb[0].mxu0
  %v143 = vadd.f32 %v75, %v142
  %v144 = vpop.f32.mrb[0].mxu0
  %145 = vdwg.mxu0
  %v146 = vtanh.pop %v143
  %v147 = vlaneseq
  %v148 = vshrl.u32 %v147, 7
  %v149 = vsub.s32 0, %v148
  %v150 = vrot.slane %v68, %v149
  %151 = vmatprep.subr.mxu0 0.0
  %152 = vmatpush1.msra.mxu0 %v34
  %153 = vmatprep.subr.mxu0 0.0
  %154 = vmatpush1.msra.mxu0 %v35
  %155 = vmatprep.subr.mxu0 0.0
  %156 = vmatpush1.msra.mxu0 %v36
  %157 = vmatprep.subr.mxu0 0.0
  %158 = vmatpush1.msra.mxu0 %v37
  %159 = vmatprep.subr.mxu0 0.0
  %160 = vmatpush1.msra.mxu0 %v38
  %161 = vmatprep.subr.mxu0 0.0
  %162 = vmatpush1.msra.mxu0 %v39
  %163 = vmatprep.subr.mxu0 0.0
  %164 = vmatpush1.msra.mxu0 %v40
  %165 = vmatprep.subr.mxu0 0.0
  %166 = vmatpush1.msra.mxu0 %v41
  %167 = vmatprep.subr.mxu0 0.0
  %168 = vmatpush1.msra.mxu0 %v42
  %169 = vmatprep.subr.mxu0 0.0
  %170 = vmatpush1.msra.mxu0 %v43
  %171 = vmatprep.subr.mxu0 0.0
  %172 = vmatpush1.msra.mxu0 %v44
  %173 = vmatprep.subr.mxu0 0.0
  %174 = vmatpush1.msra.mxu0 %v45
  %175 = vmatprep.subr.mxu0 0.0
  %176 = vmatpush1.msra.mxu0 %v46
  %177 = vmatprep.subr.mxu0 0.0
  %178 = vmatpush1.msra.mxu0 %v47
  %179 = vmatprep.subr.mxu0 0.0
  %180 = vmatpush1.msra.mxu0 %v48
  %181 = vmatprep.subr.mxu0 0.0
  %182 = vmatpush1.msra.mxu0 %v49
  %183 = vmatprep.subr.mxu0 0.0
  %184 = vmatpush1.msra.mxu0 0.0
  %185 = vmatprep.subr.mxu0 0.0
  %186 = vmatpush1.msra.mxu0 0.0
  %187 = vmatprep.subr.mxu0 0.0
  %188 = vmatpush1.msra.mxu0 0.0
  %189 = vmatprep.subr.mxu0 0.0
  %190 = vmatpush1.msra.mxu0 0.0
  %191 = vmatprep.subr.mxu0 0.0
  %192 = vmatpush1.msra.mxu0 0.0
  %193 = vmatprep.subr.mxu0 0.0
  %194 = vmatpush1.msra.mxu0 0.0
  %195 = vmatprep.subr.mxu0 0.0
  %196 = vmatpush1.msra.mxu0 0.0
  %197 = vmatprep.subr.mxu0 0.0
  %198 = vmatpush1.msra.mxu0 0.0
  %199 = vmatprep.subr.mxu0 0.0
  %200 = vmatpush1.msra.mxu0 0.0
  %201 = vmatprep.subr.mxu0 0.0
  %202 = vmatpush1.msra.mxu0 0.0
  %203 = vmatprep.subr.mxu0 0.0
  %204 = vmatpush1.msra.mxu0 0.0
  %205 = vmatprep.subr.mxu0 0.0
  %206 = vmatpush1.msra.mxu0 0.0
  %207 = vmatprep.subr.mxu0 0.0
  %208 = vmatpush1.msra.mxu0 0.0
  %209 = vmatprep.subr.mxu0 0.0
  %210 = vmatpush1.msra.mxu0 0.0
  %211 = vmatprep.subr.mxu0 0.0
  %212 = vmatpush1.msra.mxu0 0.0
  %213 = vmatprep.subr.mxu0 0.0
  %214 = vmatpush1.msra.mxu0 0.0
  %215 = vmatprep.mubr.f32.mxu0 0.0
  %216 = vmatmul.mubr.f32.gmra.mrb[0].mxu0 %v146
  %v217 = vpop.f32.mrb[0].mxu0
  %v218 = vadd.f32 %v150, %v217
  %v219 = vpop.f32.mrb[0].mxu0
  %220 = vdwg.mxu0
  %v221 = vtanh.pop %v218
  %v222 = vlaneseq
  %v223 = vshrl.u32 %v222, 7
  %v224 = vsub.s32 0, %v223
  %v225 = vrot.slane %v69, %v224
  %226 = vmatprep.subr.mxu0 0.0
  %227 = vmatpush1.msra.mxu0 %v51
  %228 = vmatprep.subr.mxu0 0.0
  %229 = vmatpush1.msra.mxu0 %v52
  %230 = vmatprep.subr.mxu0 0.0
  %231 = vmatpush1.msra.mxu0 %v53
  %232 = vmatprep.subr.mxu0 0.0
  %233 = vmatpush1.msra.mxu0 %v54
  %234 = vmatprep.subr.mxu0 0.0
  %235 = vmatpush1.msra.mxu0 %v55
  %236 = vmatprep.subr.mxu0 0.0
  %237 = vmatpush1.msra.mxu0 %v56
  %238 = vmatprep.subr.mxu0 0.0
  %239 = vmatpush1.msra.mxu0 %v57
  %240 = vmatprep.subr.mxu0 0.0
  %241 = vmatpush1.msra.mxu0 %v58
  %242 = vmatprep.subr.mxu0 0.0
  %243 = vmatpush1.msra.mxu0 %v59
  %244 = vmatprep.subr.mxu0 0.0
  %245 = vmatpush1.msra.mxu0 %v60
  %246 = vmatprep.subr.mxu0 0.0
  %247 = vmatpush1.msra.mxu0 %v61
  %248 = vmatprep.subr.mxu0 0.0
  %249 = vmatpush1.msra.mxu0 %v62
  %250 = vmatprep.subr.mxu0 0.0
  %251 = vmatpush1.msra.mxu0 %v63
  %252 = vmatprep.subr.mxu0 0.0
  %253 = vmatpush1.msra.mxu0 %v64
  %254 = vmatprep.subr.mxu0 0.0
  %255 = vmatpush1.msra.mxu0 %v65
  %256 = vmatprep.subr.mxu0 0.0
  %257 = vmatpush1.msra.mxu0 %v66
  %258 = vmatprep.subr.mxu0 0.0
  %259 = vmatpush1.msra.mxu0 0.0
  %260 = vmatprep.subr.mxu0 0.0
  %261 = vmatpush1.msra.mxu0 0.0
  %262 = vmatprep.subr.mxu0 0.0
  %263 = vmatpush1.msra.mxu0 0.0
  %264 = vmatprep.subr.mxu0 0.0
  %265 = vmatpush1.msra.mxu0 0.0
  %266 = vmatprep.subr.mxu0 0.0
  %267 = vmatpush1.msra.mxu0 0.0
  %268 = vmatprep.subr.mxu0 0.0
  %269 = vmatpush1.msra.mxu0 0.0
  %270 = vmatprep.subr.mxu0 0.0
  %271 = vmatpush1.msra.mxu0 0.0
  %272 = vmatprep.subr.mxu0 0.0
  %273 = vmatpush1.msra.mxu0 0.0
  %274 = vmatprep.subr.mxu0 0.0
  %275 = vmatpush1.msra.mxu0 0.0
  %276 = vmatprep.subr.mxu0 0.0
  %277 = vmatpush1.msra.mxu0 0.0
  %278 = vmatprep.subr.mxu0 0.0
  %279 = vmatpush1.msra.mxu0 0.0
  %280 = vmatprep.subr.mxu0 0.0
  %281 = vmatpush1.msra.mxu0 0.0
  %282 = vmatprep.subr.mxu0 0.0
  %283 = vmatpush1.msra.mxu0 0.0
  %284 = vmatprep.subr.mxu0 0.0
  %285 = vmatpush1.msra.mxu0 0.0
  %286 = vmatprep.subr.mxu0 0.0
  %287 = vmatpush1.msra.mxu0 0.0
  %288 = vmatprep.subr.mxu0 0.0
  %289 = vmatpush1.msra.mxu0 0.0
  %290 = vmatprep.mubr.f32.mxu0 0.0
  %291 = vmatmul.mubr.f32.gmra.mrb[0].mxu0 %v221
  %v292 = vpop.f32.mrb[0].mxu0
  %v293 = vadd.f32 %v225, %v292
  %v294 = vpop.f32.mrb[0].mxu0
  %295 = vdwg.mxu0
  %v296 = vtanh.pop %v293
  %v297 = vsub.f32 %v16, %v296
  %v298 = vmul.f32 %v297, %v297
  %v299 = vlaneseq
  %v300 = vshrl.u32 %v299, 7
  %v301 = vsub.s32 0, %v300
  %v302 = vrot.slane %v70, %v301
  %v303 = vmul.f32 %v298, %v302
  %304 = vadd.xlane.f32.xlu0 %v303
  %v305 = vpop.xlane.xlu0 %304
  %v306 = vlaneseq
  %v307 = vshrl.u32 %v306, 7
  %v308 = vsub.s32 0, %v307
  %v309 = vrot.slane %v71, %v308
  %v310 = vadd.f32 %v309, %v305
  %v311 = vmul.f32 %v310, -0.5
  %vm312 = vcmp.ne.f32.partialorder %v14, %v14
  %vm313 = vcmp.ne.f32.partialorder %v16, %v16
  %vm314 = vmor %vm312, %vm313
  %v315 = vsel %vm314, 1, 0
  %v316 = vcvt.s32.f32 %v315
  %317 = vmax.xlane.f32.xlu0 %v316
  %v318 = vpop.xlane.xlu0 %317
  %v319 = vlaneseq
  %v320 = vand.u32 %v319, 127
  %vm321 = vcmp.eq.s32.totalorder %v320, 0
  %vm322 = vcmp.eq.s32.totalorder %v320, 1
  %vm323 = vcmp.eq.s32.totalorder %v320, 2
  %v324 = vsel %vm323, %v318, 0.0
  %326 = vset.pattern.permute.xlu0 8
  %327 = vperm.xlu0 %326, %v293
  %v328 = vpop.permute.xlu0 %327
  %v330 = vsel %vm322, %v328, %v324
  %332 = vset.pattern.permute.xlu0 0
  %333 = vperm.xlu0 %332, %v311
  %v334 = vpop.permute.xlu0 %333
  %v336 = vsel %vm321, %v334, %v330
  %337 = vst [vmem:[%s3] sm:$0xff] %v336
  // Predicated region
  $region14: #{actor_critic_evaluate.1} parent=0 // pred_check
    _
  $region15: #{actor_critic_evaluate.1} parent=0 // pred_check_branch
    %339 = sbr.rel (0) target = $region17
  $region16: #{actor_critic_evaluate.1} parent=0 // pred_region
    _
  $region17: #{actor_critic_evaluate.1} parent=0 // pred_fallthru
    _
  // Predicated region
  $region18: #{actor_critic_evaluate.1} parent=0 // pred_check
    _
  $region19: #{actor_critic_evaluate.1} parent=0 // pred_check_branch
    %341 = sbr.rel (0) target = $region21
  $region20: #{actor_critic_evaluate.1} parent=0 // pred_region
    _
  $region21: #{actor_critic_evaluate.1} parent=0 // pred_fallthru
    _

</llo_original>
